<compile_context>
chip_gen: v5e
topology: v5e:2x2
jax: 0.10.0
libtpu: 0.0.40
codegen_flags: <defaults>
</compile_context>

<pallas_src>
import jax
import jax.numpy as jnp
from jax.experimental import pallas as pl
from jax.experimental.pallas import tpu as pltpu


def _add_kernel(x_ref, y_ref, o_ref):
    # Elementwise add of the whole VMEM tile (the FuncModule "func" hot path).
    o_ref[...] = x_ref[...] + y_ref[...]


_SMALL_BYTES = 128 << 10          # below this: one untiled VMEM block, no grid.
_TARGET_BLOCK_BYTES = 2 << 20     # ~2 MiB blocks: >=85% HBM roofline, fits v7x.
_MAX_LANES = 2048                 # cap lane width of the flattened slab.


def _min_rows_for_dtype(dtype):
    """Native sublane packing: 8 rows for 32-bit, 16 for 16-bit, 32 for 8-bit."""
    itemsize = jnp.dtype(dtype).itemsize
    return max(8, 32 // max(itemsize, 1))


def _lane_dense_2d(total, dtype):
    """Pick (rows, lanes): widest lane dim (multiple of 128, capped) while
    keeping rows >= the dtype-native sublane count (unmasked full-width
    loads/stores)."""
    min_rows = _min_rows_for_dtype(dtype)
    lanes = 128
    while (total % (lanes * 2) == 0
           and (total // (lanes * 2)) >= min_rows
           and lanes * 2 <= _MAX_LANES):
        lanes *= 2
    return total // lanes, lanes


def _pick_block_rows(rows, lanes, itemsize, min_rows):
    """Largest block_rows <= ~2 MiB budget that is a multiple of the native
    sublane count and (preferably) divides rows, avoiding a masked last block."""
    budget_rows = max(min_rows, _TARGET_BLOCK_BYTES // (lanes * itemsize))
    budget_rows = (budget_rows // min_rows) * min_rows
    budget_rows = max(min_rows, min(budget_rows, rows))
    for br in range(budget_rows, min_rows - 1, -min_rows):
        if rows % br == 0:
            return br
    return budget_rows  # fall back to cdiv grid with a ragged (masked) tail.


def func_module_forward(x, other):
    """forward(x) = torch.add(x, other), `other` a same-shaped constant."""
    assert x.shape == other.shape and x.dtype == other.dtype
    orig_shape = x.shape
    total = x.size

    if total % 128 != 0:
        # TODO(synk): element count not lane-aligned; fall back to the XLA-fused
        # add rather than padding through the kernel.
        return x + other

    itemsize = jnp.dtype(x.dtype).itemsize
    min_rows = _min_rows_for_dtype(x.dtype)
    rows, lanes = _lane_dense_2d(total, x.dtype)
    x2 = x.reshape(rows, lanes)
    y2 = other.reshape(rows, lanes)

    nbytes = total * itemsize
    if nbytes <= _SMALL_BYTES or rows < min_rows:
        # Truly tiny tensor: runtime is pure launch overhead, so drop all grid /
        # pipeline bookkeeping — single untiled VMEM block. No aliasing (x is
        # not donated; an alias would force a defensive copy).
        out2 = pl.pallas_call(
            _add_kernel,
            out_shape=jax.ShapeDtypeStruct((rows, lanes), x.dtype),
            in_specs=[
                pl.BlockSpec(memory_space=pltpu.MemorySpace.VMEM),
                pl.BlockSpec(memory_space=pltpu.MemorySpace.VMEM),
            ],
            out_specs=pl.BlockSpec(memory_space=pltpu.MemorySpace.VMEM),
        )(x2, y2)
    else:
        # Tiled path: 1-D "parallel" grid over ~2 MiB lane-dense blocks.
        # "parallel" shards blocks across both v7x TensorCores (no-op but
        # harmless on single-TC v5e/v6e). Working set = 3 arrays x 2 pipeline
        # buffers x block_bytes, so vmem_limit is sized to that plus headroom.
        block_rows = _pick_block_rows(rows, lanes, itemsize, min_rows)
        block_bytes = block_rows * lanes * itemsize
        vmem_limit = int(6 * block_bytes * 1.5)          # working set + ~50%
        vmem_limit = max(4 << 20, min(vmem_limit, 32 << 20))
        grid = (pl.cdiv(rows, block_rows),)
        out2 = pl.pallas_call(
            _add_kernel,
            out_shape=jax.ShapeDtypeStruct((rows, lanes), x.dtype),
            grid=grid,
            in_specs=[
                pl.BlockSpec((block_rows, lanes), lambda i: (i, 0)),
                pl.BlockSpec((block_rows, lanes), lambda i: (i, 0)),
            ],
            out_specs=pl.BlockSpec((block_rows, lanes), lambda i: (i, 0)),
            compiler_params=pltpu.CompilerParams(
                dimension_semantics=("parallel",),
                vmem_limit_bytes=vmem_limit,
            ),
        )(x2, y2)

    return out2.reshape(orig_shape)


if __name__ == "__main__":
    key = jax.random.PRNGKey(0)
    kx, kw = jax.random.split(key)

    # Input consistent with an NCHW conv-style tensor: batch=2, channels=4, 16x16.
    x = jax.random.normal(kx, (2, 4, 16, 16), dtype=jnp.float32)
    # Deterministically initialized constant operand (the FuncModule *args tensor).
    other = jax.random.normal(kw, (2, 4, 16, 16), dtype=jnp.float32)

    ref = x + other

    out = func_module_forward(x, other)
    jax.block_until_ready(out)

    assert out.shape == ref.shape and out.dtype == ref.dtype
    assert jnp.allclose(out, ref, atol=1e-6, rtol=1e-6)

    print("KERNEL_OK")
</pallas_src>

<mosaic_0001>
module attributes {stable_mosaic.version = 11 : i64} {
  func.func @_add_kernel(%arg0: memref<8x256xf32, #tpu.memory_space<vmem>>, %arg1: memref<8x256xf32, #tpu.memory_space<vmem>>, %arg2: memref<8x256xf32, #tpu.memory_space<vmem>>) attributes {dimension_semantics = [], scalar_prefetch = 0 : i64, scratch_operands = 0 : i64, tpu.core_type = #tpu.core_type<tc>} {
    %c0 = arith.constant 0 : index
    %c0_0 = arith.constant 0 : index
    %0 = vector.load %arg0[%c0, %c0_0] : memref<8x256xf32, #tpu.memory_space<vmem>>, vector<8x256xf32>
    %c0_1 = arith.constant 0 : index
    %c0_2 = arith.constant 0 : index
    %1 = vector.load %arg1[%c0_1, %c0_2] : memref<8x256xf32, #tpu.memory_space<vmem>>, vector<8x256xf32>
    %2 = arith.addf %0, %1 : vector<8x256xf32>
    %c0_3 = arith.constant 0 : index
    %c0_4 = arith.constant 0 : index
    %3 = vector.load %arg2[%c0_3, %c0_4] : memref<8x256xf32, #tpu.memory_space<vmem>>, vector<8x256xf32>
    tpu.vector_store %arg2[%c0_3, %c0_4], %2 {strides = array<i32>} : memref<8x256xf32, #tpu.memory_space<vmem>>, vector<8x256xf32>,
    return
  }
}

</mosaic_0001>

<llo_original>
// kernel: tpu_custom_call.1
$region0: #{tpu_custom_call.1}
  #allocation0 [shape = 'u32[]', space=smem, size = 0x4, offset = 0x4, fixed_abs, tag = 'smem constant byte address 0x4 - core index']
  #allocation1 [shape = 'u32[72,128]{1,0:T(1,128)}', space=vmem, size = 0x9000, scoped, tag = 'internal scratch']
  %s0 = inlined_call_operand.hbm [shape: f32[8,256], index: 0, kind: input, shape index: {}]
  %s1 = inlined_call_operand.hbm [shape: f32[8,256], index: 1, kind: input, shape index: {}]
  %s2 = inlined_call_operand.hbm [shape: f32[8,256], index: 2, kind: output, shape index: {}]
  %s3 = sld [smem:[#allocation0]]
  $region26: #{tpu_custom_call.1} parent=0
    _
  %s5 = ssub.s32 1, %s3
  %s6 = scalar_select 0, %s5, %s3
  $region1: #{tpu_custom_call.1} parent=0
    #allocation2 [shape = 'u8[8192]{0}', space=vmem, size = 0x2000, scoped, tag = 'input window, operand 0, single buffered']
    #allocation3 [shape = 's32[1]{0}', space=sflag, size = 0x4, scoped, tag = 'scoped memory for tpu_custom_call.1']
    #allocation4 [shape = 's32[1]{0}', space=sflag, size = 0x4, scoped, tag = 'scoped memory for tpu_custom_call.1']
    #allocation5 [shape = 'u8[8192]{0}', space=vmem, size = 0x2000, scoped, tag = 'input window, operand 1, single buffered']
    #allocation6 [shape = 's32[1]{0}', space=sflag, size = 0x4, scoped, tag = 'scoped memory for tpu_custom_call.1']
    #allocation7 [shape = 'u8[8192]{0}', space=vmem, size = 0x2000, scoped, tag = 'output window, operand 0, single buffered']
    %7 = vsyncpa [#allocation3], 0
    %8 = vsyncpa [#allocation6], 0
    %9 = vsyncpa [#allocation4], 0
    // Predicated region
    $region2: #{tpu_custom_call.1} parent=1 // pred_check
      _
    $region3: #{tpu_custom_call.1} parent=1 // pred_check_branch
      %11 = sbr.rel (0) target = $region5
    $region4: #{tpu_custom_call.1} parent=1 // pred_region
      %13 = vsyncadd [#allocation3], 0
      %s15 = sshll.u32 %s0, 4
      %s16 = int_to_ptr.hbm [resolvable:$true] %s15
      %s17 = sshll.u32 [#allocation2], 4
      %s18 = int_to_ptr.vmem [resolvable:$true] %s17
      %20 = dma.hbm_to_vmem [thread:$0]  %s16, 256, %s18, [#allocation3]
    $region5: #{tpu_custom_call.1} parent=1 // pred_fallthru
      _
    // Predicated region
    $region6: #{tpu_custom_call.1} parent=1 // pred_check
      _
    $region7: #{tpu_custom_call.1} parent=1 // pred_check_branch
      %22 = sbr.rel (0) target = $region9
    $region8: #{tpu_custom_call.1} parent=1 // pred_region
      %24 = vsyncadd [#allocation6], 0
      %s26 = sshll.u32 %s1, 4
      %s27 = int_to_ptr.hbm [resolvable:$true] %s26
      %s28 = sshll.u32 [#allocation5], 4
      %s29 = int_to_ptr.vmem [resolvable:$true] %s28
      %31 = dma.hbm_to_vmem [thread:$0]  %s27, 256, %s29, [#allocation6]
    $region9: #{tpu_custom_call.1} parent=1 // pred_fallthru
      _
    // Predicated region
    $region10: #{tpu_custom_call.1} parent=1 // pred_check
      _
    $region11: #{tpu_custom_call.1} parent=1 // pred_check_branch
      %33 = sbr.rel (0) target = $region13
    $region12: #{tpu_custom_call.1} parent=1 // pred_region
      %35 = dma.done [#allocation3], 256
    $region13: #{tpu_custom_call.1} parent=1 // pred_fallthru
      _
    // Predicated region
    $region14: #{tpu_custom_call.1} parent=1 // pred_check
      _
    $region15: #{tpu_custom_call.1} parent=1 // pred_check_branch
      %37 = sbr.rel (0) target = $region17
    $region16: #{tpu_custom_call.1} parent=1 // pred_region
      %39 = dma.done [#allocation6], 256
    $region17: #{tpu_custom_call.1} parent=1 // pred_fallthru
      _
    %v40 = vld [vmem:[#allocation2] sm:$0xff]
    %v41 = vld [vmem:[#allocation2 + $0x8] sm:$0xff]
    %v42 = vld [vmem:[#allocation5] sm:$0xff]
    %v43 = vld [vmem:[#allocation5 + $0x8] sm:$0xff]
    %v44 = vadd.f32 %v40, %v42
    %v45 = vadd.f32 %v41, %v43
    %46 = vst [vmem:[#allocation7] sm:$0xff] %v44
    %47 = vst [vmem:[#allocation7 + $0x8] sm:$0xff] %v45
    // Predicated region
    $region18: #{tpu_custom_call.1} parent=1 // pred_check
      _
    $region19: #{tpu_custom_call.1} parent=1 // pred_check_branch
      %49 = sbr.rel (0) target = $region21
    $region20: #{tpu_custom_call.1} parent=1 // pred_region
      %51 = vsyncadd [#allocation4], 0
      %s53 = sshll.u32 [#allocation7], 4
      %s54 = int_to_ptr.vmem [resolvable:$true] %s53
      %s55 = sshll.u32 %s2, 4
      %s56 = int_to_ptr.hbm [resolvable:$true] %s55
      %58 = dma.vmem_to_hbm [thread:$0]  %s54, 256, %s56, [#allocation4]
    $region21: #{tpu_custom_call.1} parent=1 // pred_fallthru
      _
    // Predicated region
    $region22: #{tpu_custom_call.1} parent=1 // pred_check
      _
    $region23: #{tpu_custom_call.1} parent=1 // pred_check_branch
      %60 = sbr.rel (0) target = $region25
    $region24: #{tpu_custom_call.1} parent=1 // pred_region
      %62 = dma.done [#allocation4], 256
    $region25: #{tpu_custom_call.1} parent=1 // pred_fallthru
      _
    %63 = vsyncpa [#allocation3], 1
    %64 = vsyncpa [#allocation6], 1
    %65 = vsyncpa [#allocation4], 1

</llo_original>
